<compile_context>
chip_gen: v7x
topology: tpu7x:2x2x1
jax: 0.10.0
libtpu: 0.0.40
codegen_flags: <defaults>
</compile_context>

<pallas_src>
import jax
import jax.numpy as jnp
from jax import lax
from jax.experimental import pallas as pl
from jax.experimental.pallas import tpu as pltpu

IN_DIM = 784
HID = 20
OUT = 10
N_W1 = IN_DIM * HID          # 15680
N_W2 = HID * OUT             # 200
TOTAL_W = N_W1 + N_W2        # 15880


def _stable_softplus(rho):
    # log(1 + exp(rho)) without overflow: the exp argument is always <= 0.
    return jnp.maximum(rho, 0.0) + jnp.log(1.0 + jnp.exp(-jnp.abs(rho)))


def _bnn_kernel(x_ref, p1_ref, p2_ref, b_ref, w1_ref, w2_ref, lp_ref):
    """Fused: sample W1/W2 (lane-dense), run the 2-layer MLP, emit outputs.

    x_ref : (N, 784)      input images, flattened
    p1_ref: (3, 20, 784)  stacked [mu1, rho1, eps1] in PyTorch (out,in) layout
    p2_ref: (3, 10, 20)   stacked [mu2, rho2, eps2]
    b_ref : (2, 20)       row 0 = b1 (20), row 1 = b2 padded (first 10 valid)
    """
    # ---- weight sampling: w = mu + softplus(rho) * eps --------------------
    # TODO(synk): the epsilon draw (torch.randn inside sample_weights) is
    # passed in as an explicit input instead of using pltpu.prng_* so results
    # stay reproducible against the pure-JAX reference.
    w1 = p1_ref[0] + _stable_softplus(p1_ref[1]) * p1_ref[2]   # (20, 784)
    w2 = p2_ref[0] + _stable_softplus(p2_ref[1]) * p2_ref[2]   # (10, 20)
    w1_ref[...] = w1
    w2_ref[...] = w2

    # ---- forward: log_softmax(relu(x @ W1.T + b1) @ W2.T + b2, dim=1) -----
    x = x_ref[...]                                             # (N, 784)
    b1 = b_ref[0:1, :]                                         # (1, 20)
    b2 = b_ref[1:2, :OUT]                                      # (1, 10)

    # Transposed-RHS contraction: contract dim 1 of x with dim 1 of w1,
    # keeping w1/w2 in their lane-dense (out_features, in_features) layout.
    nt = (((1,), (1,)), ((), ()))
    h = lax.dot_general(x, w1, dimension_numbers=nt,
                        preferred_element_type=jnp.float32) + b1
    h = jnp.maximum(h, 0.0)                                    # (N, 20)
    logits = lax.dot_general(h, w2, dimension_numbers=nt,
                             preferred_element_type=jnp.float32) + b2

    m = jnp.max(logits, axis=1, keepdims=True)
    lse = m + jnp.log(jnp.sum(jnp.exp(logits - m), axis=1, keepdims=True))
    lp_ref[...] = logits - lse                                 # (N, 10)


def bnn_forward(images, mu, rho, b1, b2, eps):
    """Returns (weights, log_digit_probabilities) like BNN.forward.

    images: (N, 1, 28, 28) f32
    mu, rho, eps: (TOTAL_W, 1) f32  (eps is the externally supplied N(0,1) draw)
    b1: (HID,) f32, b2: (OUT,) f32  (PyTorch Linear biases, not resampled)
    """
    n = images.shape[0]
    x = images.reshape(n, IN_DIM).astype(jnp.float32)

    # Per-layer views of the flat PyTorch parameter vectors, kept in the
    # native (out_features, in_features) layout -- no transposes anywhere.
    def per_layer(p):
        p = p.reshape(TOTAL_W)
        return (p[:N_W1].reshape(HID, IN_DIM),     # (20, 784)
                p[N_W1:].reshape(OUT, HID))        # (10, 20)

    mu1, mu2 = per_layer(mu)
    rho1, rho2 = per_layer(rho)
    eps1, eps2 = per_layer(eps)

    # Pack to 4 input DMAs: [mu,rho,eps] stacks per layer + one bias array.
    p1 = jnp.stack([mu1, rho1, eps1])              # (3, 20, 784)
    p2 = jnp.stack([mu2, rho2, eps2])              # (3, 10, 20)
    biases = jnp.zeros((2, HID), jnp.float32)
    biases = biases.at[0, :].set(b1.astype(jnp.float32))
    biases = biases.at[1, :OUT].set(b2.astype(jnp.float32))

    vmem = pl.BlockSpec(memory_space=pltpu.MemorySpace.VMEM)
    w1, w2, log_probs = pl.pallas_call(
        _bnn_kernel,
        out_shape=(
            jax.ShapeDtypeStruct((HID, IN_DIM), jnp.float32),   # W1 (20, 784)
            jax.ShapeDtypeStruct((OUT, HID), jnp.float32),      # W2 (10, 20)
            jax.ShapeDtypeStruct((n, OUT), jnp.float32),        # log_probs
        ),
        in_specs=[vmem, vmem, vmem, vmem],
        out_specs=(vmem, vmem, vmem),
    )(x, p1, p2, biases)

    # Flat weight vector in PyTorch ordering (row-major over (out, in)): since
    # the kernel already emits the native layout this is reshape+concat only.
    # Kept 1-D internally; the (TOTAL_W, 1) column shape the module returns is
    # produced only at the very end so downstream consumers of the flat vector
    # never inherit a 1-lane-wide layout.
    weights_flat = jnp.concatenate([w1.reshape(-1), w2.reshape(-1)])
    return weights_flat.reshape(TOTAL_W, 1), log_probs


if __name__ == "__main__":
    key = jax.random.PRNGKey(0)
    k_img, k_mu, k_rho, k_eps, k_b1, k_b2 = jax.random.split(key, 6)

    batch = 8
    images = 0.05 * jax.random.normal(k_img, (batch, 1, 28, 28),
                                      dtype=jnp.float32)

    # Parameters mirroring the __init__ distributions:
    mu = jax.random.normal(k_mu, (TOTAL_W, 1), dtype=jnp.float32)          # randn
    rho = jax.random.exponential(k_rho, (TOTAL_W, 1), dtype=jnp.float32)   # exponential_()
    # PyTorch nn.Linear bias init: U(-1/sqrt(fan_in), 1/sqrt(fan_in))
    b1 = jax.random.uniform(k_b1, (HID,), dtype=jnp.float32,
                            minval=-1.0 / (IN_DIM ** 0.5),
                            maxval=1.0 / (IN_DIM ** 0.5))
    b2 = jax.random.uniform(k_b2, (OUT,), dtype=jnp.float32,
                            minval=-1.0 / (HID ** 0.5),
                            maxval=1.0 / (HID ** 0.5))
    # Epsilon draw used by sample_weights (torch.randn in the original).
    eps = jax.random.normal(k_eps, (TOTAL_W, 1), dtype=jnp.float32)

    weights, log_probs = jax.jit(bnn_forward)(images, mu, rho, b1, b2, eps)
    jax.block_until_ready((weights, log_probs))

    # Pure-JAX reference (same math as the PyTorch module).
    def reference(images, mu, rho, b1, b2, eps):
        x = images.reshape(-1, IN_DIM)
        w = mu + _stable_softplus(rho) * eps
        w1 = w[:N_W1].reshape(HID, IN_DIM)
        w2 = w[N_W1:].reshape(OUT, HID)
        h = jnp.maximum(x @ w1.T + b1, 0.0)
        logits = h @ w2.T + b2
        return w, jax.nn.log_softmax(logits, axis=1)

    ref_w, ref_lp = reference(images, mu, rho, b1, b2, eps)

    assert weights.shape == (TOTAL_W, 1)
    assert log_probs.shape == (batch, OUT)
    # Sampled weights are purely elementwise -> tight tolerance.
    assert bool(jnp.allclose(weights, ref_w, rtol=1e-4, atol=1e-4))
    # Looser tolerance on log_probs: in-kernel MXU vs XLA matmul may take
    # different f32 precision paths (K=784 accumulation).
    assert bool(jnp.allclose(log_probs, ref_lp, rtol=2e-2, atol=2e-1))
    row_sums = jnp.exp(log_probs).sum(axis=1)
    assert bool(jnp.all(jnp.abs(row_sums - 1.0) < 1e-3))

    print("KERNEL_OK")
</pallas_src>

<mosaic_0001>
module attributes {stable_mosaic.version = 11 : i64} {
  func.func @_bnn_kernel(%arg0: memref<8x784xf32, #tpu.memory_space<vmem>>, %arg1: memref<3x20x784xf32, #tpu.memory_space<vmem>>, %arg2: memref<3x10x20xf32, #tpu.memory_space<vmem>>, %arg3: memref<2x20xf32, #tpu.memory_space<vmem>>, %arg4: memref<20x784xf32, #tpu.memory_space<vmem>>, %arg5: memref<10x20xf32, #tpu.memory_space<vmem>>, %arg6: memref<8x10xf32, #tpu.memory_space<vmem>>) attributes {dimension_semantics = [], scalar_prefetch = 0 : i64, scratch_operands = 0 : i64, tpu.core_type = #tpu.core_type<tc>} {
    %c0 = arith.constant 0 : index
    %c0_0 = arith.constant 0 : index
    %c0_1 = arith.constant 0 : index
    %0 = vector.load %arg1[%c0, %c0_0, %c0_1] : memref<3x20x784xf32, #tpu.memory_space<vmem>>, vector<1x20x784xf32>
    %1 = vector.shape_cast %0 : vector<1x20x784xf32> to vector<20x784xf32>
    %c1 = arith.constant 1 : index
    %c0_2 = arith.constant 0 : index
    %c0_3 = arith.constant 0 : index
    %2 = vector.load %arg1[%c1, %c0_2, %c0_3] : memref<3x20x784xf32, #tpu.memory_space<vmem>>, vector<1x20x784xf32>
    %3 = vector.shape_cast %2 : vector<1x20x784xf32> to vector<20x784xf32>
    %cst = arith.constant 0.000000e+00 : f32
    %4 = vector.broadcast %cst : f32 to vector<20x784xf32>
    %5 = arith.maximumf %3, %4 : vector<20x784xf32>
    %6 = math.absf %3 : vector<20x784xf32>
    %cst_4 = arith.constant 0.000000e+00 : f32
    %7 = vector.broadcast %cst_4 : f32 to vector<20x784xf32>
    %8 = arith.subf %7, %6 : vector<20x784xf32>
    %9 = math.exp %8 : vector<20x784xf32>
    %cst_5 = arith.constant 1.000000e+00 : f32
    %10 = vector.broadcast %cst_5 : f32 to vector<20x784xf32>
    %11 = arith.addf %10, %9 : vector<20x784xf32>
    %12 = math.log %11 : vector<20x784xf32>
    %13 = arith.addf %5, %12 : vector<20x784xf32>
    %c2 = arith.constant 2 : index
    %c0_6 = arith.constant 0 : index
    %c0_7 = arith.constant 0 : index
    %14 = vector.load %arg1[%c2, %c0_6, %c0_7] : memref<3x20x784xf32, #tpu.memory_space<vmem>>, vector<1x20x784xf32>
    %15 = vector.shape_cast %14 : vector<1x20x784xf32> to vector<20x784xf32>
    %16 = arith.mulf %13, %15 : vector<20x784xf32>
    %17 = arith.addf %1, %16 : vector<20x784xf32>
    %c0_8 = arith.constant 0 : index
    %c0_9 = arith.constant 0 : index
    %c0_10 = arith.constant 0 : index
    %18 = vector.load %arg2[%c0_8, %c0_9, %c0_10] : memref<3x10x20xf32, #tpu.memory_space<vmem>>, vector<1x10x20xf32>
    %19 = vector.shape_cast %18 : vector<1x10x20xf32> to vector<10x20xf32>
    %c1_11 = arith.constant 1 : index
    %c0_12 = arith.constant 0 : index
    %c0_13 = arith.constant 0 : index
    %20 = vector.load %arg2[%c1_11, %c0_12, %c0_13] : memref<3x10x20xf32, #tpu.memory_space<vmem>>, vector<1x10x20xf32>
    %21 = vector.shape_cast %20 : vector<1x10x20xf32> to vector<10x20xf32>
    %cst_14 = arith.constant 0.000000e+00 : f32
    %22 = vector.broadcast %cst_14 : f32 to vector<10x20xf32>
    %23 = arith.maximumf %21, %22 : vector<10x20xf32>
    %24 = math.absf %21 : vector<10x20xf32>
    %cst_15 = arith.constant 0.000000e+00 : f32
    %25 = vector.broadcast %cst_15 : f32 to vector<10x20xf32>
    %26 = arith.subf %25, %24 : vector<10x20xf32>
    %27 = math.exp %26 : vector<10x20xf32>
    %cst_16 = arith.constant 1.000000e+00 : f32
    %28 = vector.broadcast %cst_16 : f32 to vector<10x20xf32>
    %29 = arith.addf %28, %27 : vector<10x20xf32>
    %30 = math.log %29 : vector<10x20xf32>
    %31 = arith.addf %23, %30 : vector<10x20xf32>
    %c2_17 = arith.constant 2 : index
    %c0_18 = arith.constant 0 : index
    %c0_19 = arith.constant 0 : index
    %32 = vector.load %arg2[%c2_17, %c0_18, %c0_19] : memref<3x10x20xf32, #tpu.memory_space<vmem>>, vector<1x10x20xf32>
    %33 = vector.shape_cast %32 : vector<1x10x20xf32> to vector<10x20xf32>
    %34 = arith.mulf %31, %33 : vector<10x20xf32>
    %35 = arith.addf %19, %34 : vector<10x20xf32>
    %c0_20 = arith.constant 0 : index
    %c0_21 = arith.constant 0 : index
    %36 = vector.load %arg4[%c0_20, %c0_21] : memref<20x784xf32, #tpu.memory_space<vmem>>, vector<20x784xf32>
    tpu.vector_store %arg4[%c0_20, %c0_21], %17 {strides = array<i32>} : memref<20x784xf32, #tpu.memory_space<vmem>>, vector<20x784xf32>,
    %c0_22 = arith.constant 0 : index
    %c0_23 = arith.constant 0 : index
    %37 = vector.load %arg5[%c0_22, %c0_23] : memref<10x20xf32, #tpu.memory_space<vmem>>, vector<10x20xf32>
    tpu.vector_store %arg5[%c0_22, %c0_23], %35 {strides = array<i32>} : memref<10x20xf32, #tpu.memory_space<vmem>>, vector<10x20xf32>,
    %c0_24 = arith.constant 0 : index
    %c0_25 = arith.constant 0 : index
    %38 = vector.load %arg0[%c0_24, %c0_25] : memref<8x784xf32, #tpu.memory_space<vmem>>, vector<8x784xf32>
    %c0_26 = arith.constant 0 : index
    %c0_27 = arith.constant 0 : index
    %39 = vector.load %arg3[%c0_26, %c0_27] : memref<2x20xf32, #tpu.memory_space<vmem>>, vector<1x20xf32>
    %c1_28 = arith.constant 1 : index
    %c0_29 = arith.constant 0 : index
    %40 = vector.load %arg3[%c1_28, %c0_29] : memref<2x20xf32, #tpu.memory_space<vmem>>, vector<1x10xf32>
    %cst_30 = arith.constant dense<0.000000e+00> : vector<8x20xf32>
    %41 = tpu.matmul %38, %17, %cst_30 {dimension_numbers = #tpu.dot_dimension_numbers<[1], [1], [0], [0], [0, 0, 1, 0], [], []>} : vector<8x784xf32>, vector<20x784xf32>, vector<8x20xf32> -> vector<8x20xf32>
    %42 = vector.broadcast %39 : vector<1x20xf32> to vector<8x20xf32>
    %43 = arith.addf %41, %42 : vector<8x20xf32>
    %cst_31 = arith.constant 0.000000e+00 : f32
    %44 = vector.broadcast %cst_31 : f32 to vector<8x20xf32>
    %45 = arith.maximumf %43, %44 : vector<8x20xf32>
    %cst_32 = arith.constant dense<0.000000e+00> : vector<8x10xf32>
    %46 = tpu.matmul %45, %35, %cst_32 {dimension_numbers = #tpu.dot_dimension_numbers<[1], [1], [0], [0], [0, 0, 1, 0], [], []>} : vector<8x20xf32>, vector<10x20xf32>, vector<8x10xf32> -> vector<8x10xf32>
    %47 = vector.broadcast %40 : vector<1x10xf32> to vector<8x10xf32>
    %48 = arith.addf %46, %47 : vector<8x10xf32>
    %cst_33 = arith.constant dense<0xFF800000> : vector<8xf32>
    %49 = vector.multi_reduction <maximumf>, %48, %cst_33 [1] : vector<8x10xf32> to vector<8xf32>
    %50 = vector.shape_cast %49 : vector<8xf32> to vector<8x1xf32>
    %51 = vector.broadcast %50 : vector<8x1xf32> to vector<8x10xf32>
    %52 = arith.subf %48, %51 : vector<8x10xf32>
    %53 = math.exp %52 : vector<8x10xf32>
    %cst_34 = arith.constant dense<0.000000e+00> : vector<8xf32>
    %54 = vector.multi_reduction <add>, %53, %cst_34 [1] : vector<8x10xf32> to vector<8xf32>
    %55 = vector.shape_cast %54 : vector<8xf32> to vector<8x1xf32>
    %56 = math.log %55 : vector<8x1xf32>
    %57 = arith.addf %50, %56 : vector<8x1xf32>
    %58 = vector.broadcast %57 : vector<8x1xf32> to vector<8x10xf32>
    %59 = arith.subf %48, %58 : vector<8x10xf32>
    %c0_35 = arith.constant 0 : index
    %c0_36 = arith.constant 0 : index
    %60 = vector.load %arg6[%c0_35, %c0_36] : memref<8x10xf32, #tpu.memory_space<vmem>>, vector<8x10xf32>
    tpu.vector_store %arg6[%c0_35, %c0_36], %59 {strides = array<i32>} : memref<8x10xf32, #tpu.memory_space<vmem>>, vector<8x10xf32>,
    return
  }
}

</mosaic_0001>

<llo_original>
// kernel: bnn_forward.1
$region0: #{bnn_forward.1}
  #allocation0 [shape = 'u32[]', space=smem, size = 0x4, offset = 0x4, fixed_abs, tag = 'smem constant byte address 0x4 - core index']
  #allocation1 [shape = 'u32[144,128]{1,0:T(1,128)}', space=vmem, size = 0x12000, scoped, tag = 'internal scratch']
  %s0 = inlined_call_operand.vmem [shape: f32[8,784], index: 0, kind: input, shape index: {}]
  %s1 = inlined_call_operand.vmem [shape: f32[3,20,784], index: 1, kind: input, shape index: {}]
  %s2 = inlined_call_operand.vmem [shape: f32[3,10,20], index: 2, kind: input, shape index: {}]
  %s3 = inlined_call_operand.vmem [shape: f32[2,20], index: 3, kind: input, shape index: {}]
  %s4 = inlined_call_operand.vmem [shape: f32[20,784], index: 4, kind: output, shape index: {0}]
  %s5 = inlined_call_operand.vmem [shape: f32[10,20], index: 5, kind: output, shape index: {1}]
  %s6 = inlined_call_operand.hbm [shape: f32[8,10], index: 6, kind: output, shape index: {2}]
  %7 = xla_tuple %s4, %s5, %s6
  %s8 = sld [smem:[#allocation0]]
  $region42: #{bnn_forward.1} parent=0
    _
  %s10 = ssub.s32 1, %s8
  %s11 = scalar_select 0, %s10, %s8
  $region1: #{bnn_forward.1} parent=0
    #allocation2 [shape = 'u8[4096]{0}', space=vmem, size = 0x1000, scoped, tag = 'output window, operand 2, single buffered']
    #allocation3 [shape = 's32[1]{0}', space=sflag, size = 0x4, scoped, tag = 'scoped memory for bnn_forward.1']
    %12 = vsyncpa [#allocation3], 0
    // Predicated region
    $region2: #{bnn_forward.1} parent=1 // pred_check
      _
    $region3: #{bnn_forward.1} parent=1 // pred_check_branch
      %14 = sbr.rel (0) target = $region5
    $region4: #{bnn_forward.1} parent=1 // pred_region
      _
    $region5: #{bnn_forward.1} parent=1 // pred_fallthru
      _
    // Predicated region
    $region6: #{bnn_forward.1} parent=1 // pred_check
      _
    $region7: #{bnn_forward.1} parent=1 // pred_check_branch
      %16 = sbr.rel (0) target = $region9
    $region8: #{bnn_forward.1} parent=1 // pred_region
      _
    $region9: #{bnn_forward.1} parent=1 // pred_fallthru
      _
    // Predicated region
    $region10: #{bnn_forward.1} parent=1 // pred_check
      _
    $region11: #{bnn_forward.1} parent=1 // pred_check_branch
      %18 = sbr.rel (0) target = $region13
    $region12: #{bnn_forward.1} parent=1 // pred_region
      _
    $region13: #{bnn_forward.1} parent=1 // pred_fallthru
      _
    // Predicated region
    $region14: #{bnn_forward.1} parent=1 // pred_check
      _
    $region15: #{bnn_forward.1} parent=1 // pred_check_branch
      %20 = sbr.rel (0) target = $region17
    $region16: #{bnn_forward.1} parent=1 // pred_region
      _
    $region17: #{bnn_forward.1} parent=1 // pred_fallthru
      _
    %v21 = vld [vmem:[%s1] sm:$0xff]
    %v22 = vld [vmem:[%s1 + $0x8] sm:$0xff]
    %v23 = vld [vmem:[%s1 + $0x10] sm:$0xff]
    %v24 = vld [vmem:[%s1 + $0x18] sm:$0xff]
    %v25 = vld [vmem:[%s1 + $0x20] sm:$0xff]
    %v26 = vld [vmem:[%s1 + $0x28] sm:$0xff]
    %v27 = vld [vmem:[%s1 + $0x30] sm:$0xff]
    %v28 = vld [vmem:[%s1 + $0x38] sm:$0xff]
    %v29 = vld [vmem:[%s1 + $0x40] sm:$0xff]
    %v30 = vld [vmem:[%s1 + $0x48] sm:$0xff]
    %v31 = vld [vmem:[%s1 + $0x50] sm:$0xff]
    %v32 = vld [vmem:[%s1 + $0x58] sm:$0xff]
    %v33 = vld [vmem:[%s1 + $0x60] sm:$0xff]
    %v34 = vld [vmem:[%s1 + $0x68] sm:$0xff]
    %v35 = vld [vmem:[%s1 + $0x70] sm:$0xf]
    %v36 = vld [vmem:[%s1 + $0x78] sm:$0xf]
    %v37 = vld [vmem:[%s1 + $0x80] sm:$0xf]
    %v38 = vld [vmem:[%s1 + $0x88] sm:$0xf]
    %v39 = vld [vmem:[%s1 + $0x90] sm:$0xf]
    %v40 = vld [vmem:[%s1 + $0x98] sm:$0xf]
    %v41 = vld [vmem:[%s1 + $0xa0] sm:$0xf]
    %s42 = scalar_lea.vmem %s1, 168
    %v43 = vld [vmem:[%s42] sm:$0xff]
    %v44 = vld [vmem:[%s42 + $0x8] sm:$0xff]
    %v45 = vld [vmem:[%s42 + $0x10] sm:$0xff]
    %v46 = vld [vmem:[%s42 + $0x18] sm:$0xff]
    %v47 = vld [vmem:[%s42 + $0x20] sm:$0xff]
    %v48 = vld [vmem:[%s42 + $0x28] sm:$0xff]
    %v49 = vld [vmem:[%s42 + $0x30] sm:$0xff]
    %v50 = vld [vmem:[%s42 + $0x38] sm:$0xff]
    %v51 = vld [vmem:[%s42 + $0x40] sm:$0xff]
    %v52 = vld [vmem:[%s42 + $0x48] sm:$0xff]
    %v53 = vld [vmem:[%s42 + $0x50] sm:$0xff]
    %v54 = vld [vmem:[%s42 + $0x58] sm:$0xff]
    %v55 = vld [vmem:[%s42 + $0x60] sm:$0xff]
    %v56 = vld [vmem:[%s42 + $0x68] sm:$0xff]
    %v57 = vld [vmem:[%s42 + $0x70] sm:$0xf]
    %v58 = vld [vmem:[%s42 + $0x78] sm:$0xf]
    %v59 = vld [vmem:[%s42 + $0x80] sm:$0xf]
    %v60 = vld [vmem:[%s42 + $0x88] sm:$0xf]
    %v61 = vld [vmem:[%s42 + $0x90] sm:$0xf]
    %v62 = vld [vmem:[%s42 + $0x98] sm:$0xf]
    %v63 = vld [vmem:[%s42 + $0xa0] sm:$0xf]
    %v64 = vmax.f32 %v43, 0.0
    %v65 = vmax.f32 %v44, 0.0
    %v66 = vmax.f32 %v45, 0.0
    %v67 = vmax.f32 %v46, 0.0
    %v68 = vmax.f32 %v47, 0.0
    %v69 = vmax.f32 %v48, 0.0
    %v70 = vmax.f32 %v49, 0.0
    %v71 = vmax.f32 %v50, 0.0
    %v72 = vmax.f32 %v51, 0.0
    %v73 = vmax.f32 %v52, 0.0
    %v74 = vmax.f32 %v53, 0.0
    %v75 = vmax.f32 %v54, 0.0
    %v76 = vmax.f32 %v55, 0.0
    %v77 = vmax.f32 %v56, 0.0
    %v78 = vmax.f32 %v57, 0.0
    %v79 = vmax.f32 %v58, 0.0
    %v80 = vmax.f32 %v59, 0.0
    %v81 = vmax.f32 %v60, 0.0
    %v82 = vmax.f32 %v61, 0.0
    %v83 = vmax.f32 %v62, 0.0
    %v84 = vmax.f32 %v63, 0.0
    %v85 = vand.u32 2147483647, %v43
    %v86 = vand.u32 2147483647, %v44
    %v87 = vand.u32 2147483647, %v45
    %v88 = vand.u32 2147483647, %v46
    %v89 = vand.u32 2147483647, %v47
    %v90 = vand.u32 2147483647, %v48
    %v91 = vand.u32 2147483647, %v49
    %v92 = vand.u32 2147483647, %v50
    %v93 = vand.u32 2147483647, %v51
    %v94 = vand.u32 2147483647, %v52
    %v95 = vand.u32 2147483647, %v53
    %v96 = vand.u32 2147483647, %v54
    %v97 = vand.u32 2147483647, %v55
    %v98 = vand.u32 2147483647, %v56
    %v99 = vand.u32 2147483647, %v57
    %v100 = vand.u32 2147483647, %v58
    %v101 = vand.u32 2147483647, %v59
    %v102 = vand.u32 2147483647, %v60
    %v103 = vand.u32 2147483647, %v61
    %v104 = vand.u32 2147483647, %v62
    %v105 = vand.u32 2147483647, %v63
    %v106 = vsub.f32 0.0, %v85
    %v107 = vsub.f32 0.0, %v86
    %v108 = vsub.f32 0.0, %v87
    %v109 = vsub.f32 0.0, %v88
    %v110 = vsub.f32 0.0, %v89
    %v111 = vsub.f32 0.0, %v90
    %v112 = vsub.f32 0.0, %v91
    %v113 = vsub.f32 0.0, %v92
    %v114 = vsub.f32 0.0, %v93
    %v115 = vsub.f32 0.0, %v94
    %v116 = vsub.f32 0.0, %v95
    %v117 = vsub.f32 0.0, %v96
    %v118 = vsub.f32 0.0, %v97
    %v119 = vsub.f32 0.0, %v98
    %v120 = vsub.f32 0.0, %v99
    %v121 = vsub.f32 0.0, %v100
    %v122 = vsub.f32 0.0, %v101
    %v123 = vsub.f32 0.0, %v102
    %v124 = vsub.f32 0.0, %v103
    %v125 = vsub.f32 0.0, %v104
    %v126 = vsub.f32 0.0, %v105
    %v127 = vmul.f32 %v106, 1.442695
    %v128 = vpow.pop %v127
    %v129 = vmul.f32 %v107, 1.442695
    %v130 = vpow.pop %v129
    %v131 = vmul.f32 %v108, 1.442695
    %v132 = vpow.pop %v131
    %v133 = vmul.f32 %v109, 1.442695
    %v134 = vpow.pop %v133
    %v135 = vmul.f32 %v110, 1.442695
    %v136 = vpow.pop %v135
    %v137 = vmul.f32 %v111, 1.442695
    %v138 = vpow.pop %v137
    %v139 = vmul.f32 %v112, 1.442695
    %v140 = vpow.pop %v139
    %v141 = vmul.f32 %v113, 1.442695
    %v142 = vpow.pop %v141
    %v143 = vmul.f32 %v114, 1.442695
    %v144 = vpow.pop %v143
    %v145 = vmul.f32 %v115, 1.442695
    %v146 = vpow.pop %v145
    %v147 = vmul.f32 %v116, 1.442695
    %v148 = vpow.pop %v147
    %v149 = vmul.f32 %v117, 1.442695
    %v150 = vpow.pop %v149
    %v151 = vmul.f32 %v118, 1.442695
    %v152 = vpow.pop %v151
    %v153 = vmul.f32 %v119, 1.442695
    %v154 = vpow.pop %v153
    %v155 = vmul.f32 %v120, 1.442695
    %v156 = vpow.pop %v155
    %v157 = vmul.f32 %v121, 1.442695
    %v158 = vpow.pop %v157
    %v159 = vmul.f32 %v122, 1.442695
    %v160 = vpow.pop %v159
    %v161 = vmul.f32 %v123, 1.442695
    %v162 = vpow.pop %v161
    %v163 = vmul.f32 %v124, 1.442695
    %v164 = vpow.pop %v163
    %v165 = vmul.f32 %v125, 1.442695
    %v166 = vpow.pop %v165
    %v167 = vmul.f32 %v126, 1.442695
    %v168 = vpow.pop %v167
    %v169 = vadd.f32 %v128, 1.0
    %v170 = vadd.f32 %v130, 1.0
    %v171 = vadd.f32 %v132, 1.0
    %v172 = vadd.f32 %v134, 1.0
    %v173 = vadd.f32 %v136, 1.0
    %v174 = vadd.f32 %v138, 1.0
    %v175 = vadd.f32 %v140, 1.0
    %v176 = vadd.f32 %v142, 1.0
    %v177 = vadd.f32 %v144, 1.0
    %v178 = vadd.f32 %v146, 1.0
    %v179 = vadd.f32 %v148, 1.0
    %v180 = vadd.f32 %v150, 1.0
    %v181 = vadd.f32 %v152, 1.0
    %v182 = vadd.f32 %v154, 1.0
    %v183 = vadd.f32 %v156, 1.0
    %v184 = vadd.f32 %v158, 1.0
    %v185 = vadd.f32 %v160, 1.0
    %v186 = vadd.f32 %v162, 1.0
    %v187 = vadd.f32 %v164, 1.0
    %v188 = vadd.f32 %v166, 1.0
    %v189 = vadd.f32 %v168, 1.0
    %v190 = vlog2.pop %v169
    %v191 = vmul.f32 %v190, 0.6931472
    %v192 = vlog2.pop %v170
    %v193 = vmul.f32 %v192, 0.6931472
    %v194 = vlog2.pop %v171
    %v195 = vmul.f32 %v194, 0.6931472
    %v196 = vlog2.pop %v172
    %v197 = vmul.f32 %v196, 0.6931472
    %v198 = vlog2.pop %v173
    %v199 = vmul.f32 %v198, 0.6931472
    %v200 = vlog2.pop %v174
    %v201 = vmul.f32 %v200, 0.6931472
    %v202 = vlog2.pop %v175
    %v203 = vmul.f32 %v202, 0.6931472
    %v204 = vlog2.pop %v176
    %v205 = vmul.f32 %v204, 0.6931472
    %v206 = vlog2.pop %v177
    %v207 = vmul.f32 %v206, 0.6931472
    %v208 = vlog2.pop %v178
    %v209 = vmul.f32 %v208, 0.6931472
    %v210 = vlog2.pop %v179
    %v211 = vmul.f32 %v210, 0.6931472
    %v212 = vlog2.pop %v180
    %v213 = vmul.f32 %v212, 0.6931472
    %v214 = vlog2.pop %v181
    %v215 = vmul.f32 %v214, 0.6931472
    %v216 = vlog2.pop %v182
    %v217 = vmul.f32 %v216, 0.6931472
    %v218 = vlog2.pop %v183
    %v219 = vmul.f32 %v218, 0.6931472
    %v220 = vlog2.pop %v184
    %v221 = vmul.f32 %v220, 0.6931472
    %v222 = vlog2.pop %v185
    %v223 = vmul.f32 %v222, 0.6931472
    %v224 = vlog2.pop %v186
    %v225 = vmul.f32 %v224, 0.6931472
    %v226 = vlog2.pop %v187
    %v227 = vmul.f32 %v226, 0.6931472
    %v228 = vlog2.pop %v188
    %v229 = vmul.f32 %v228, 0.6931472
    %v230 = vlog2.pop %v189
    %v231 = vmul.f32 %v230, 0.6931472
    %v232 = vadd.f32 %v64, %v191
    %v233 = vadd.f32 %v65, %v193
    %v234 = vadd.f32 %v66, %v195
    %v235 = vadd.f32 %v67, %v197
    %v236 = vadd.f32 %v68, %v199
    %v237 = vadd.f32 %v69, %v201
    %v238 = vadd.f32 %v70, %v203
    %v239 = vadd.f32 %v71, %v205
    %v240 = vadd.f32 %v72, %v207
    %v241 = vadd.f32 %v73, %v209
    %v242 = vadd.f32 %v74, %v211
    %v243 = vadd.f32 %v75, %v213
    %v244 = vadd.f32 %v76, %v215
    %v245 = vadd.f32 %v77, %v217
    %v246 = vadd.f32 %v78, %v219
    %v247 = vadd.f32 %v79, %v221
    %v248 = vadd.f32 %v80, %v223
    %v249 = vadd.f32 %v81, %v225
    %v250 = vadd.f32 %v82, %v227
    %v251 = vadd.f32 %v83, %v229
    %v252 = vadd.f32 %v84, %v231
    %s253 = scalar_lea.vmem %s1, 336
    %v254 = vld [vmem:[%s253] sm:$0xff]
    %v255 = vld [vmem:[%s253 + $0x8] sm:$0xff]
    %v256 = vld [vmem:[%s253 + $0x10] sm:$0xff]
    %v257 = vld [vmem:[%s253 + $0x18] sm:$0xff]
    %v258 = vld [vmem:[%s253 + $0x20] sm:$0xff]
    %v259 = vld [vmem:[%s253 + $0x28] sm:$0xff]
    %v260 = vld [vmem:[%s253 + $0x30] sm:$0xff]
    %v261 = vld [vmem:[%s253 + $0x38] sm:$0xff]
    %v262 = vld [vmem:[%s253 + $0x40] sm:$0xff]
    %v263 = vld [vmem:[%s253 + $0x48] sm:$0xff]
    %v264 = vld [vmem:[%s253 + $0x50] sm:$0xff]
    %v265 = vld [vmem:[%s253 + $0x58] sm:$0xff]
    %v266 = vld [vmem:[%s253 + $0x60] sm:$0xff]
    %v267 = vld [vmem:[%s253 + $0x68] sm:$0xff]
    %v268 = vld [vmem:[%s253 + $0x70] sm:$0xf]
    %v269 = vld [vmem:[%s253 + $0x78] sm:$0xf]
    %v270 = vld [vmem:[%s253 + $0x80] sm:$0xf]
    %v271 = vld [vmem:[%s253 + $0x88] sm:$0xf]
    %v272 = vld [vmem:[%s253 + $0x90] sm:$0xf]
    %v273 = vld [vmem:[%s253 + $0x98] sm:$0xf]
    %v274 = vld [vmem:[%s253 + $0xa0] sm:$0xf]
    %v275 = vmul.f32 %v232, %v254
    %v276 = vmul.f32 %v233, %v255
    %v277 = vmul.f32 %v234, %v256
    %v278 = vmul.f32 %v235, %v257
    %v279 = vmul.f32 %v236, %v258
    %v280 = vmul.f32 %v237, %v259
    %v281 = vmul.f32 %v238, %v260
    %v282 = vmul.f32 %v239, %v261
    %v283 = vmul.f32 %v240, %v262
    %v284 = vmul.f32 %v241, %v263
    %v285 = vmul.f32 %v242, %v264
    %v286 = vmul.f32 %v243, %v265
    %v287 = vmul.f32 %v244, %v266
    %v288 = vmul.f32 %v245, %v267
    %v289 = vmul.f32 %v246, %v268
    %v290 = vmul.f32 %v247, %v269
    %v291 = vmul.f32 %v248, %v270
    %v292 = vmul.f32 %v249, %v271
    %v293 = vmul.f32 %v250, %v272
    %v294 = vmul.f32 %v251, %v273
    %v295 = vmul.f32 %v252, %v274
    %v296 = vadd.f32 %v21, %v275
    %v297 = vadd.f32 %v22, %v276
    %v298 = vadd.f32 %v23, %v277
    %v299 = vadd.f32 %v24, %v278
    %v300 = vadd.f32 %v25, %v279
    %v301 = vadd.f32 %v26, %v280
    %v302 = vadd.f32 %v27, %v281
    %v303 = vadd.f32 %v28, %v282
    %v304 = vadd.f32 %v29, %v283
    %v305 = vadd.f32 %v30, %v284
    %v306 = vadd.f32 %v31, %v285
    %v307 = vadd.f32 %v32, %v286
    %v308 = vadd.f32 %v33, %v287
    %v309 = vadd.f32 %v34, %v288
    %v310 = vadd.f32 %v35, %v289
    %v311 = vadd.f32 %v36, %v290
    %v312 = vadd.f32 %v37, %v291
    %v313 = vadd.f32 %v38, %v292
    %v314 = vadd.f32 %v39, %v293
    %v315 = vadd.f32 %v40, %v294
    %v316 = vadd.f32 %v41, %v295
    %v317 = vld [vmem:[%s2] sm:$0xff]
    %v318 = vld [vmem:[%s2 + $0x8] sm:$0x3]
    %s319 = scalar_lea.vmem %s2, 16
    %v320 = vld [vmem:[%s319] sm:$0xff]
    %v321 = vld [vmem:[%s319 + $0x8] sm:$0x3]
    %v322 = vmax.f32 %v320, 0.0
    %v323 = vmax.f32 %v321, 0.0
    %v324 = vand.u32 2147483647, %v320
    %v325 = vand.u32 2147483647, %v321
    %v326 = vsub.f32 0.0, %v324
    %v327 = vsub.f32 0.0, %v325
    %v328 = vmul.f32 %v326, 1.442695
    %v329 = vpow.pop %v328
    %v330 = vmul.f32 %v327, 1.442695
    %v331 = vpow.pop %v330
    %v332 = vadd.f32 %v329, 1.0
    %v333 = vadd.f32 %v331, 1.0
    %v334 = vlog2.pop %v332
    %v335 = vmul.f32 %v334, 0.6931472
    %v336 = vlog2.pop %v333
    %v337 = vmul.f32 %v336, 0.6931472
    %v338 = vadd.f32 %v322, %v335
    %v339 = vadd.f32 %v323, %v337
    %s340 = scalar_lea.vmem %s2, 32
    %v341 = vld [vmem:[%s340] sm:$0xff]
    %v342 = vld [vmem:[%s340 + $0x8] sm:$0x3]
    %v343 = vmul.f32 %v338, %v341
    %v344 = vmul.f32 %v339, %v342
    %v345 = vadd.f32 %v317, %v343
    %v346 = vadd.f32 %v318, %v344
    %347 = vst [vmem:[%s4] sm:$0xff] %v296
    %348 = vst [vmem:[%s4 + $0x8] sm:$0xff] %v297
    %349 = vst [vmem:[%s4 + $0x10] sm:$0xff] %v298
    %350 = vst [vmem:[%s4 + $0x18] sm:$0xff] %v299
    %351 = vst [vmem:[%s4 + $0x20] sm:$0xff] %v300
    %352 = vst [vmem:[%s4 + $0x28] sm:$0xff] %v301
    %vm353 = vcmask 130048
    %354 = vst.msk [vmem:[%s4 + $0x30] sm:$0xff] %vm353, %v302
    %355 = vst [vmem:[%s4 + $0x38] sm:$0xff] %v303
    %356 = vst [vmem:[%s4 + $0x40] sm:$0xff] %v304
    %357 = vst [vmem:[%s4 + $0x48] sm:$0xff] %v305
    %358 = vst [vmem:[%s4 + $0x50] sm:$0xff] %v306
    %359 = vst [vmem:[%s4 + $0x58] sm:$0xff] %v307
    %360 = vst [vmem:[%s4 + $0x60] sm:$0xff] %v308
    %361 = vst.msk [vmem:[%s4 + $0x68] sm:$0xff] %vm353, %v309
    %362 = vst [vmem:[%s4 + $0x70] sm:$0xf] %v310
    %363 = vst [vmem:[%s4 + $0x78] sm:$0xf] %v311
    %364 = vst [vmem:[%s4 + $0x80] sm:$0xf] %v312
    %365 = vst [vmem:[%s4 + $0x88] sm:$0xf] %v313
    %366 = vst [vmem:[%s4 + $0x90] sm:$0xf] %v314
    %367 = vst [vmem:[%s4 + $0x98] sm:$0xf] %v315
    %vm368 = vcmask 125952
    %369 = vst.msk [vmem:[%s4 + $0xa0] sm:$0xf] %vm368, %v316
    %vm370 = vcmask 162816
    %371 = vst.msk [vmem:[%s5] sm:$0xff] %vm370, %v345
    %vm372 = vcmask 156672
    %373 = vst.msk [vmem:[%s5 + $0x8] sm:$0x3] %vm372, %v346
    %v374 = vld [vmem:[%s0] sm:$0xff]
    %v375 = vld [vmem:[%s0 + $0x8] sm:$0xff]
    %v376 = vld [vmem:[%s0 + $0x10] sm:$0xff]
    %v377 = vld [vmem:[%s0 + $0x18] sm:$0xff]
    %v378 = vld [vmem:[%s0 + $0x20] sm:$0xff]
    %v379 = vld [vmem:[%s0 + $0x28] sm:$0xff]
    %v380 = vld [vmem:[%s0 + $0x30] sm:$0xff]
    %v381 = vld [vmem:[%s3] sm:$0x1]
    %v382 = vld [vmem:[%s3 + $0x1] sm:$0x1]
    %v383 = vlaneseq
    %v384 = vshrl.u32 %v383, 7
    %v385 = vsub.s32 0, %v384
    %v386 = vrot.slane %v381, %v385
    %v388 = vsel %vm353, %v380, 0
    %v391 = vsel %vm353, %v302, 0
    %v394 = vsel %vm353, %v309, 0
    %v397 = vsel %vm353, %v316, 0
    %399 = vmatprep.subr.mxu0 %v297
    %400 = vmatpush1.xpose.msra.mxu0 %v296
    %401 = vmatprep.subr.mxu0 %v304
    %402 = vmatpush1.xpose.msra.mxu0 %v303
    %403 = vmatprep.subr.mxu0 %v311
    %404 = vmatpush1.xpose.msra.mxu0 %v310
    %405 = vmatprep.subr.mxu0 0.0
    %406 = vmatpush1.xpose.msra.mxu0 0.0
    %407 = vmatprep.subr.mxu0 0.0
    %408 = vmatpush1.xpose.msra.mxu0 0.0
    %409 = vmatprep.subr.mxu0 0.0
    %410 = vmatpush1.xpose.msra.mxu0 0.0
    %411 = vmatprep.subr.mxu0 0.0
    %412 = vmatpush1.xpose.msra.mxu0 0.0
    %413 = vmatprep.subr.mxu0 0.0
    %414 = vmatpush1.xpose.msra.mxu0 0.0
    %415 = vmatprep.subr.mxu0 0.0
    %416 = vmatpush1.xpose.msra.mxu0 0.0
    %417 = vmatprep.subr.mxu0 0.0
    %418 = vmatpush1.xpose.msra.mxu0 0.0
    %419 = vmatprep.subr.mxu0 0.0
    %420 = vmatpush1.xpose.msra.mxu0 0.0
    %421 = vmatprep.subr.mxu0 0.0
    %422 = vmatpush1.xpose.msra.mxu0 0.0
    %423 = vmatprep.subr.mxu0 0.0
    %424 = vmatpush1.xpose.msra.mxu0 0.0
    %425 = vmatprep.subr.mxu0 0.0
    %426 = vmatpush1.xpose.msra.mxu0 0.0
    %427 = vmatprep.subr.mxu0 0.0
    %428 = vmatpush1.xpose.msra.mxu0 0.0
    %429 = vmatprep.subr.mxu0 0.0
    %430 = vmatpush1.xpose.msra.mxu0 0.0
    %431 = vmatprep.subr.mxu0 0.0
    %432 = vmatpush1.xpose.msra.mxu0 0.0
    %433 = vmatprep.subr.mxu0 0.0
    %434 = vmatpush1.xpose.msra.mxu0 0.0
    %435 = vmatprep.subr.mxu0 0.0
    %436 = vmatpush1.xpose.msra.mxu0 0.0
    %437 = vmatprep.subr.mxu0 0.0
    %438 = vmatpush1.xpose.msra.mxu0 0.0
    %439 = vmatprep.subr.mxu0 0.0
    %440 = vmatpush1.xpose.msra.mxu0 0.0
    %441 = vmatprep.subr.mxu0 0.0
    %442 = vmatpush1.xpose.msra.mxu0 0.0
    %443 = vmatprep.subr.mxu0 0.0
    %444 = vmatpush1.xpose.msra.mxu0 0.0
    %445 = vmatprep.subr.mxu0 0.0
    %446 = vmatpush1.xpose.msra.mxu0 0.0
    %447 = vmatprep.subr.mxu0 0.0
    %448 = vmatpush1.xpose.msra.mxu0 0.0
    %449 = vmatprep.subr.mxu0 0.0
    %450 = vmatpush1.xpose.msra.mxu0 0.0
    %451 = vmatprep.subr.mxu0 0.0
    %452 = vmatpush1.xpose.msra.mxu0 0.0
    %453 = vmatprep.subr.mxu0 0.0
    %454 = vmatpush1.xpose.msra.mxu0 0.0
    %455 = vmatprep.subr.mxu0 0.0
    %456 = vmatpush1.xpose.msra.mxu0 0.0
    %457 = vmatprep.subr.mxu0 0.0
    %458 = vmatpush1.xpose.msra.mxu0 0.0
    %459 = vmatprep.subr.mxu0 0.0
    %460 = vmatpush1.xpose.msra.mxu0 0.0
    %461 = vmatprep.subr.mxu0 0.0
    %462 = vmatpush1.xpose.msra.mxu0 0.0
    %463 = vmatprep.mubr.f32.mxu0 %v375
    %464 = vmatmul.mubr.f32.gmra.mrb[0].mxu0 %v374
    %v465 = vpop.f32.mrb[0].mxu0
    %v466 = vadd.f32 %v386, %v465
    %v467 = vpop.f32.mrb[0].mxu0
    %468 = vdwg.mxu0
    %469 = vmatprep.subr.mxu0 %v299
    %470 = vmatpush1.xpose.msra.mxu0 %v298
    %471 = vmatprep.subr.mxu0 %v306
    %472 = vmatpush1.xpose.msra.mxu0 %v305
    %473 = vmatprep.subr.mxu0 %v313
    %474 = vmatpush1.xpose.msra.mxu0 %v312
    %475 = vmatprep.subr.mxu0 0.0
    %476 = vmatpush1.xpose.msra.mxu0 0.0
    %477 = vmatprep.subr.mxu0 0.0
    %478 = vmatpush1.xpose.msra.mxu0 0.0
    %479 = vmatprep.subr.mxu0 0.0
    %480 = vmatpush1.xpose.msra.mxu0 0.0
    %481 = vmatprep.subr.mxu0 0.0
    %482 = vmatpush1.xpose.msra.mxu0 0.0
    %483 = vmatprep.subr.mxu0 0.0
    %484 = vmatpush1.xpose.msra.mxu0 0.0
    %485 = vmatprep.subr.mxu0 0.0
    %486 = vmatpush1.xpose.msra.mxu0 0.0
    %487 = vmatprep.subr.mxu0 0.0
    %488 = vmatpush1.xpose.msra.mxu0 0.0
    %489 = vmatprep.subr.mxu0 0.0
    %490 = vmatpush1.xpose.msra.mxu0 0.0
    %491 = vmatprep.subr.mxu0 0.0
    %492 = vmatpush1.xpose.msra.mxu0 0.0
    %493 = vmatprep.subr.mxu0 0.0
    %494 = vmatpush1.xpose.msra.mxu0 0.0
    %495 = vmatprep.subr.mxu0 0.0
    %496 = vmatpush1.xpose.msra.mxu0 0.0
    %497 = vmatprep.subr.mxu0 0.0
    %498 = vmatpush1.xpose.msra.mxu0 0.0
    %499 = vmatprep.subr.mxu0 0.0
    %500 = vmatpush1.xpose.msra.mxu0 0.0
    %501 = vmatprep.subr.mxu0 0.0
    %502 = vmatpush1.xpose.msra.mxu0 0.0
    %503 = vmatprep.subr.mxu0 0.0
    %504 = vmatpush1.xpose.msra.mxu0 0.0
    %505 = vmatprep.subr.mxu0 0.0
    %506 = vmatpush1.xpose.msra.mxu0 0.0
    %507 = vmatprep.subr.mxu0 0.0
    %508 = vmatpush1.xpose.msra.mxu0 0.0
    %509 = vmatprep.subr.mxu0 0.0
    %510 = vmatpush1.xpose.msra.mxu0 0.0
    %511 = vmatprep.subr.mxu0 0.0
    %512 = vmatpush1.xpose.msra.mxu0 0.0
    %513 = vmatprep.subr.mxu0 0.0
    %514 = vmatpush1.xpose.msra.mxu0 0.0
    %515 = vmatprep.subr.mxu0 0.0
    %516 = vmatpush1.xpose.msra.mxu0 0.0
    %517 = vmatprep.subr.mxu0 0.0
    %518 = vmatpush1.xpose.msra.mxu0 0.0
    %519 = vmatprep.subr.mxu0 0.0
    %520 = vmatpush1.xpose.msra.mxu0 0.0
    %521 = vmatprep.subr.mxu0 0.0
    %522 = vmatpush1.xpose.msra.mxu0 0.0
    %523 = vmatprep.subr.mxu0 0.0
    %524 = vmatpush1.xpose.msra.mxu0 0.0
    %525 = vmatprep.subr.mxu0 0.0
    %526 = vmatpush1.xpose.msra.mxu0 0.0
    %527 = vmatprep.subr.mxu0 0.0
    %528 = vmatpush1.xpose.msra.mxu0 0.0
    %529 = vmatprep.subr.mxu0 0.0
    %530 = vmatpush1.xpose.msra.mxu0 0.0
    %531 = vmatprep.subr.mxu0 0.0
    %532 = vmatpush1.xpose.msra.mxu0 0.0
    %533 = vmatprep.mubr.f32.mxu0 %v377
    %534 = vmatmul.mubr.f32.gmra.mrb[0].mxu0 %v376
    %v535 = vpop.f32.mrb[0].mxu0
    %v536 = vadd.f32 %v466, %v535
    %v537 = vpop.f32.mrb[0].mxu0
    %538 = vdwg.mxu0
    %539 = vmatprep.subr.mxu0 %v301
    %540 = vmatpush1.xpose.msra.mxu0 %v300
    %541 = vmatprep.subr.mxu0 %v308
    %542 = vmatpush1.xpose.msra.mxu0 %v307
    %543 = vmatprep.subr.mxu0 %v315
    %544 = vmatpush1.xpose.msra.mxu0 %v314
    %545 = vmatprep.subr.mxu0 0.0
    %546 = vmatpush1.xpose.msra.mxu0 0.0
    %547 = vmatprep.subr.mxu0 0.0
    %548 = vmatpush1.xpose.msra.mxu0 0.0
    %549 = vmatprep.subr.mxu0 0.0
    %550 = vmatpush1.xpose.msra.mxu0 0.0
    %551 = vmatprep.subr.mxu0 0.0
    %552 = vmatpush1.xpose.msra.mxu0 0.0
    %553 = vmatprep.subr.mxu0 0.0
    %554 = vmatpush1.xpose.msra.mxu0 0.0
    %555 = vmatprep.subr.mxu0 0.0
    %556 = vmatpush1.xpose.msra.mxu0 0.0
    %557 = vmatprep.subr.mxu0 0.0
    %558 = vmatpush1.xpose.msra.mxu0 0.0
    %559 = vmatprep.subr.mxu0 0.0
    %560 = vmatpush1.xpose.msra.mxu0 0.0
    %561 = vmatprep.subr.mxu0 0.0
    %562 = vmatpush1.xpose.msra.mxu0 0.0
    %563 = vmatprep.subr.mxu0 0.0
    %564 = vmatpush1.xpose.msra.mxu0 0.0
    %565 = vmatprep.subr.mxu0 0.0
    %566 = vmatpush1.xpose.msra.mxu0 0.0
    %567 = vmatprep.subr.mxu0 0.0
    %568 = vmatpush1.xpose.msra.mxu0 0.0
    %569 = vmatprep.subr.mxu0 0.0
    %570 = vmatpush1.xpose.msra.mxu0 0.0
    %571 = vmatprep.subr.mxu0 0.0
    %572 = vmatpush1.xpose.msra.mxu0 0.0
    %573 = vmatprep.subr.mxu0 0.0
    %574 = vmatpush1.xpose.msra.mxu0 0.0
    %575 = vmatprep.subr.mxu0 0.0
    %576 = vmatpush1.xpose.msra.mxu0 0.0
    %577 = vmatprep.subr.mxu0 0.0
    %578 = vmatpush1.xpose.msra.mxu0 0.0
    %579 = vmatprep.subr.mxu0 0.0
    %580 = vmatpush1.xpose.msra.mxu0 0.0
    %581 = vmatprep.subr.mxu0 0.0
    %582 = vmatpush1.xpose.msra.mxu0 0.0
    %583 = vmatprep.subr.mxu0 0.0
    %584 = vmatpush1.xpose.msra.mxu0 0.0
    %585 = vmatprep.subr.mxu0 0.0
    %586 = vmatpush1.xpose.msra.mxu0 0.0
    %587 = vmatprep.subr.mxu0 0.0
    %588 = vmatpush1.xpose.msra.mxu0 0.0
    %589 = vmatprep.subr.mxu0 0.0
    %590 = vmatpush1.xpose.msra.mxu0 0.0
    %591 = vmatprep.subr.mxu0 0.0
    %592 = vmatpush1.xpose.msra.mxu0 0.0
    %593 = vmatprep.subr.mxu0 0.0
    %594 = vmatpush1.xpose.msra.mxu0 0.0
    %595 = vmatprep.subr.mxu0 0.0
    %596 = vmatpush1.xpose.msra.mxu0 0.0
    %597 = vmatprep.subr.mxu0 0.0
    %598 = vmatpush1.xpose.msra.mxu0 0.0
    %599 = vmatprep.subr.mxu0 0.0
    %600 = vmatpush1.xpose.msra.mxu0 0.0
    %601 = vmatprep.subr.mxu0 0.0
    %602 = vmatpush1.xpose.msra.mxu0 0.0
    %603 = vmatprep.mubr.f32.mxu0 %v379
    %604 = vmatmul.mubr.f32.gmra.mrb[0].mxu0 %v378
    %v605 = vpop.f32.mrb[0].mxu0
    %v606 = vadd.f32 %v536, %v605
    %v607 = vpop.f32.mrb[0].mxu0
    %608 = vdwg.mxu0
    %609 = vmatprep.subr.mxu0 0.0
    %610 = vmatpush1.xpose.msra.mxu0 %v391
    %611 = vmatprep.subr.mxu0 0.0
    %612 = vmatpush1.xpose.msra.mxu0 %v394
    %613 = vmatprep.subr.mxu0 0.0
    %614 = vmatpush1.xpose.msra.mxu0 %v397
    %615 = vmatprep.subr.mxu0 0.0
    %616 = vmatpush1.xpose.msra.mxu0 0.0
    %617 = vmatprep.subr.mxu0 0.0
    %618 = vmatpush1.xpose.msra.mxu0 0.0
    %619 = vmatprep.subr.mxu0 0.0
    %620 = vmatpush1.xpose.msra.mxu0 0.0
    %621 = vmatprep.subr.mxu0 0.0
    %622 = vmatpush1.xpose.msra.mxu0 0.0
    %623 = vmatprep.subr.mxu0 0.0
    %624 = vmatpush1.xpose.msra.mxu0 0.0
    %625 = vmatprep.subr.mxu0 0.0
    %626 = vmatpush1.xpose.msra.mxu0 0.0
    %627 = vmatprep.subr.mxu0 0.0
    %628 = vmatpush1.xpose.msra.mxu0 0.0
    %629 = vmatprep.subr.mxu0 0.0
    %630 = vmatpush1.xpose.msra.mxu0 0.0
    %631 = vmatprep.subr.mxu0 0.0
    %632 = vmatpush1.xpose.msra.mxu0 0.0
    %633 = vmatprep.subr.mxu0 0.0
    %634 = vmatpush1.xpose.msra.mxu0 0.0
    %635 = vmatprep.subr.mxu0 0.0
    %636 = vmatpush1.xpose.msra.mxu0 0.0
    %637 = vmatprep.subr.mxu0 0.0
    %638 = vmatpush1.xpose.msra.mxu0 0.0
    %639 = vmatprep.subr.mxu0 0.0
    %640 = vmatpush1.xpose.msra.mxu0 0.0
    %641 = vmatprep.subr.mxu0 0.0
    %642 = vmatpush1.xpose.msra.mxu0 0.0
    %643 = vmatprep.subr.mxu0 0.0
    %644 = vmatpush1.xpose.msra.mxu0 0.0
    %645 = vmatprep.subr.mxu0 0.0
    %646 = vmatpush1.xpose.msra.mxu0 0.0
    %647 = vmatprep.subr.mxu0 0.0
    %648 = vmatpush1.xpose.msra.mxu0 0.0
    %649 = vmatprep.subr.mxu0 0.0
    %650 = vmatpush1.xpose.msra.mxu0 0.0
    %651 = vmatprep.subr.mxu0 0.0
    %652 = vmatpush1.xpose.msra.mxu0 0.0
    %653 = vmatprep.subr.mxu0 0.0
    %654 = vmatpush1.xpose.msra.mxu0 0.0
    %655 = vmatprep.subr.mxu0 0.0
    %656 = vmatpush1.xpose.msra.mxu0 0.0
    %657 = vmatprep.subr.mxu0 0.0
    %658 = vmatpush1.xpose.msra.mxu0 0.0
    %659 = vmatprep.subr.mxu0 0.0
    %660 = vmatpush1.xpose.msra.mxu0 0.0
    %661 = vmatprep.subr.mxu0 0.0
    %662 = vmatpush1.xpose.msra.mxu0 0.0
    %663 = vmatprep.subr.mxu0 0.0
    %664 = vmatpush1.xpose.msra.mxu0 0.0
    %665 = vmatprep.subr.mxu0 0.0
    %666 = vmatpush1.xpose.msra.mxu0 0.0
    %667 = vmatprep.subr.mxu0 0.0
    %668 = vmatpush1.xpose.msra.mxu0 0.0
    %669 = vmatprep.subr.mxu0 0.0
    %670 = vmatpush1.xpose.msra.mxu0 0.0
    %671 = vmatprep.subr.mxu0 0.0
    %672 = vmatpush1.xpose.msra.mxu0 0.0
    %673 = vmatprep.mubr.f32.mxu0 0.0
    %674 = vmatmul.mubr.f32.gmra.mrb[0].mxu0 %v388
    %v675 = vpop.f32.mrb[0].mxu0
    %v676 = vadd.f32 %v606, %v675
    %v677 = vpop.f32.mrb[0].mxu0
    %678 = vdwg.mxu0
    %v679 = vmax.f32 %v676, 0.0
    %v680 = vlaneseq
    %v681 = vshrl.u32 %v680, 7
    %v682 = vsub.s32 0, %v681
    %v683 = vrot.slane %v382, %v682
    %v685 = vsel %vm370, %v679, 0
    %v688 = vsel %vm370, %v345, 0
    %v691 = vsel %vm370, %v346, 0
    %693 = vmatprep.subr.mxu0 0.0
    %694 = vmatpush1.xpose.msra.mxu0 %v688
    %695 = vmatprep.subr.mxu0 0.0
    %696 = vmatpush1.xpose.msra.mxu0 %v691
    %697 = vmatprep.subr.mxu0 0.0
    %698 = vmatpush1.xpose.msra.mxu0 0.0
    %699 = vmatprep.subr.mxu0 0.0
    %700 = vmatpush1.xpose.msra.mxu0 0.0
    %701 = vmatprep.subr.mxu0 0.0
    %702 = vmatpush1.xpose.msra.mxu0 0.0
    %703 = vmatprep.subr.mxu0 0.0
    %704 = vmatpush1.xpose.msra.mxu0 0.0
    %705 = vmatprep.subr.mxu0 0.0
    %706 = vmatpush1.xpose.msra.mxu0 0.0
    %707 = vmatprep.subr.mxu0 0.0
    %708 = vmatpush1.xpose.msra.mxu0 0.0
    %709 = vmatprep.subr.mxu0 0.0
    %710 = vmatpush1.xpose.msra.mxu0 0.0
    %711 = vmatprep.subr.mxu0 0.0
    %712 = vmatpush1.xpose.msra.mxu0 0.0
    %713 = vmatprep.subr.mxu0 0.0
    %714 = vmatpush1.xpose.msra.mxu0 0.0
    %715 = vmatprep.subr.mxu0 0.0
    %716 = vmatpush1.xpose.msra.mxu0 0.0
    %717 = vmatprep.subr.mxu0 0.0
    %718 = vmatpush1.xpose.msra.mxu0 0.0
    %719 = vmatprep.subr.mxu0 0.0
    %720 = vmatpush1.xpose.msra.mxu0 0.0
    %721 = vmatprep.subr.mxu0 0.0
    %722 = vmatpush1.xpose.msra.mxu0 0.0
    %723 = vmatprep.subr.mxu0 0.0
    %724 = vmatpush1.xpose.msra.mxu0 0.0
    %725 = vmatprep.subr.mxu0 0.0
    %726 = vmatpush1.xpose.msra.mxu0 0.0
    %727 = vmatprep.subr.mxu0 0.0
    %728 = vmatpush1.xpose.msra.mxu0 0.0
    %729 = vmatprep.subr.mxu0 0.0
    %730 = vmatpush1.xpose.msra.mxu0 0.0
    %731 = vmatprep.subr.mxu0 0.0
    %732 = vmatpush1.xpose.msra.mxu0 0.0
    %733 = vmatprep.subr.mxu0 0.0
    %734 = vmatpush1.xpose.msra.mxu0 0.0
    %735 = vmatprep.subr.mxu0 0.0
    %736 = vmatpush1.xpose.msra.mxu0 0.0
    %737 = vmatprep.subr.mxu0 0.0
    %738 = vmatpush1.xpose.msra.mxu0 0.0
    %739 = vmatprep.subr.mxu0 0.0
    %740 = vmatpush1.xpose.msra.mxu0 0.0
    %741 = vmatprep.subr.mxu0 0.0
    %742 = vmatpush1.xpose.msra.mxu0 0.0
    %743 = vmatprep.subr.mxu0 0.0
    %744 = vmatpush1.xpose.msra.mxu0 0.0
    %745 = vmatprep.subr.mxu0 0.0
    %746 = vmatpush1.xpose.msra.mxu0 0.0
    %747 = vmatprep.subr.mxu0 0.0
    %748 = vmatpush1.xpose.msra.mxu0 0.0
    %749 = vmatprep.subr.mxu0 0.0
    %750 = vmatpush1.xpose.msra.mxu0 0.0
    %751 = vmatprep.subr.mxu0 0.0
    %752 = vmatpush1.xpose.msra.mxu0 0.0
    %753 = vmatprep.subr.mxu0 0.0
    %754 = vmatpush1.xpose.msra.mxu0 0.0
    %755 = vmatprep.subr.mxu0 0.0
    %756 = vmatpush1.xpose.msra.mxu0 0.0
    %757 = vmatprep.mubr.f32.mxu0 0.0
    %758 = vmatmul.mubr.f32.gmra.mrb[0].mxu0 %v685
    %v759 = vpop.f32.mrb[0].mxu0
    %v760 = vadd.f32 %v683, %v759
    %v761 = vpop.f32.mrb[0].mxu0
    %762 = vdwg.mxu0
    %vm763 = vcmask 80896
    %v764 = vsel %vm763, %v760, -inf
    %765 = vmax.xlane.f32.xlu0 %v764
    %v766 = vpop.xlane.xlu0 %765
    %v767 = vsub.f32 %v760, %v766
    %v768 = vmul.f32 %v767, 1.442695
    %v769 = vpow.pop %v768
    %v770 = vsel %vm763, %v769, 0.0
    %771 = vadd.xlane.f32.xlu0 %v770
    %v772 = vpop.xlane.xlu0 %771
    %v773 = vlog2.pop %v772
    %v774 = vmul.f32 %v773, 0.6931472
    %v775 = vadd.f32 %v766, %v774
    %v776 = vsub.f32 %v760, %v775
    %777 = vst.msk [vmem:[#allocation2] sm:$0xff] %vm763, %v776
    // Predicated region
    $region18: #{bnn_forward.1} parent=1 // pred_check
      _
    $region19: #{bnn_forward.1} parent=1 // pred_check_branch
      %779 = sbr.rel (0) target = $region21
    $region20: #{bnn_forward.1} parent=1 // pred_region
      _
    $region21: #{bnn_forward.1} parent=1 // pred_fallthru
      _
    // Predicated region
    $region22: #{bnn_forward.1} parent=1 // pred_check
      _
    $region23: #{bnn_forward.1} parent=1 // pred_check_branch
      %781 = sbr.rel (0) target = $region25
    $region24: #{bnn_forward.1} parent=1 // pred_region
      _
    $region25: #{bnn_forward.1} parent=1 // pred_fallthru
      _
    // Predicated region
    $region26: #{bnn_forward.1} parent=1 // pred_check
      _
    $region27: #{bnn_forward.1} parent=1 // pred_check_branch
      %783 = sbr.rel (0) target = $region29
    $region28: #{bnn_forward.1} parent=1 // pred_region
      %s785 = ssub.s32 128, 128
      %786 = vsyncadd [#allocation3], %s785
      %s788 = sshll.u32 [#allocation2], 4
      %s789 = int_to_ptr.vmem [resolvable:$true] %s788
      %791 = dma.vmem_to_hbm [thread:$0]  %s789, 128, %s6, [#allocation3]
    $region29: #{bnn_forward.1} parent=1 // pred_fallthru
      _
    // Predicated region
    $region30: #{bnn_forward.1} parent=1 // pred_check
      _
    $region31: #{bnn_forward.1} parent=1 // pred_check_branch
      %793 = sbr.rel (0) target = $region33
    $region32: #{bnn_forward.1} parent=1 // pred_region
      _
    $region33: #{bnn_forward.1} parent=1 // pred_fallthru
      _
    // Predicated region
    $region34: #{bnn_forward.1} parent=1 // pred_check
      _
    $region35: #{bnn_forward.1} parent=1 // pred_check_branch
      %795 = sbr.rel (0) target = $region37
    $region36: #{bnn_forward.1} parent=1 // pred_region
      _
    $region37: #{bnn_forward.1} parent=1 // pred_fallthru
      _
    // Predicated region
    $region38: #{bnn_forward.1} parent=1 // pred_check
      _
    $region39: #{bnn_forward.1} parent=1 // pred_check_branch
      %797 = sbr.rel (0) target = $region41
    $region40: #{bnn_forward.1} parent=1 // pred_region
      %798 = dma.done [#allocation3], 128
    $region41: #{bnn_forward.1} parent=1 // pred_fallthru
      _
    %799 = vsyncpa [#allocation3], 1

</llo_original>
